<compile_context>
chip_gen: v5e
topology: v5e:2x2
jax: 0.10.0
libtpu: 0.0.40
codegen_flags: <defaults>
</compile_context>

<pallas_src>
import functools

import jax
import jax.numpy as jnp
from jax.experimental import pallas as pl
from jax.experimental.pallas import tpu as pltpu


def _round_up(x, m):
    return -(-x // m) * m


def _per_input_block_bytes():
    """Per-generation input-block sizing (bytes) for this HBM-bound kernel."""
    try:
        kind = jax.devices()[0].device_kind.lower()
    except Exception:
        kind = ""
    if "v7" in kind:
        return 8 * 1024 * 1024   # ~3.2 TB/s: bigger blocks hide per-step overhead
    if "v6" in kind:
        return 6 * 1024 * 1024   # ~1.4 TB/s
    # v5e and anything unknown: conservative, well under 16 MiB scoped VMEM
    # once double-buffered (2 inputs x 2 buffers x 2 MiB = 8 MiB).
    return 2 * 1024 * 1024


def _joints_mse_block_kernel(*refs, tm, n_rows, use_target_weight, needs_mask):
    """One grid step == one (tm, HW) tile of the flattened (N, HW) arrays.

    refs = (pred_ref, gt_ref[, w_ref], out_ref)
      pred_ref, gt_ref : VMEM blocks (tm, HW)
      w_ref            : VMEM block  (tm, 1)   (only if use_target_weight)
      out_ref          : VMEM block  (1, 128) -- per-block partial sum,
                         broadcast across lanes (lane-dense unmasked store).
    """
    if use_target_weight:
        pred_ref, gt_ref, w_ref, out_ref = refs
    else:
        pred_ref, gt_ref, out_ref = refs
        w_ref = None

    p = pred_ref[...].astype(jnp.float32)         # (tm, HW)
    g = gt_ref[...].astype(jnp.float32)           # (tm, HW)
    d = p - g
    dd = d * d                                    # (tm, HW)

    if use_target_weight:
        w = w_ref[...].astype(jnp.float32)        # (tm, 1)
        dd = dd * (w * w)                         # w^2 * (p-g)^2, per row

    if needs_mask:
        # Ragged last block: rows beyond the true N hold undefined data from
        # the partial DMA -- zero them out before reducing.
        i = pl.program_id(0)
        valid = n_rows - i * tm
        rowmask = jax.lax.broadcasted_iota(jnp.int32, (tm, 1), 0) < valid
        dd = jnp.where(rowmask, dd, 0.0)

    s = jnp.sum(dd)                               # scalar partial for this block
    out_ref[...] = jnp.broadcast_to(s.reshape(1, 1), out_ref.shape)


def joints_mse_loss(output, target, target_weight, use_target_weight=False,
                    block_rows=None):
    """JAX/Pallas equivalent of JointsMSELoss.forward.

    output, target: (B, K, H, W); target_weight: (B, K, 1).  Returns a scalar.
    """
    B, K, H, W = output.shape
    HW = H * W
    N = B * K
    denom = float(N * HW)   # == B * HW * K

    # Free, contiguous reshapes -- no transposes, no extra HBM traffic.
    pred = output.reshape(N, HW)
    gt = target.reshape(N, HW)

    itemsize = jnp.dtype(pred.dtype).itemsize

    # Pick tm: biggest multiple-of-8 row tile whose per-input block is the
    # per-generation target size.  No padding of pred/gt anywhere.
    if block_rows is None:
        blk_bytes = _per_input_block_bytes()
        tm = max(8, (blk_bytes // (HW * itemsize)) // 8 * 8)
    else:
        tm = max(8, _round_up(block_rows, 8))
    # Never exceed the (8-aligned) number of rows ...
    tm = min(tm, _round_up(N, 8))
    # ... and keep at least 2 blocks when possible so the "parallel" grid axis
    # can actually balance across both TensorCores on v7x.
    if N > 8:
        tm = min(tm, max(8, _round_up(-(-N // 2), 8)))

    grid = pl.cdiv(N, tm)
    needs_mask = (N % tm) != 0   # static: only emit mask code when required

    in_specs = [
        pl.BlockSpec((tm, HW), lambda i: (i, 0)),
        pl.BlockSpec((tm, HW), lambda i: (i, 0)),
    ]
    operands = [pred, gt]
    if use_target_weight:
        # Only DMA the weights when they are actually used.
        w = target_weight.reshape(N, 1)
        in_specs.append(pl.BlockSpec((tm, 1), lambda i: (i, 0)))
        operands.append(w)

    kernel = functools.partial(
        _joints_mse_block_kernel, tm=tm, n_rows=N,
        use_target_weight=use_target_weight, needs_mask=needs_mask)

    # Explicit VMEM budget: 2 inputs x 2 pipeline buffers x block, plus the
    # (lane-padded) weight blocks, output blocks and compiler-scratch margin.
    # Clamp to 48 MiB so it is safe on every generation (v7x physical = 64 MiB).
    block_in_bytes = tm * HW * itemsize
    w_block_bytes = (2 * tm * 128 * 4) if use_target_weight else 0
    vmem_limit = 4 * block_in_bytes + w_block_bytes + 2 * 128 * 4 + (8 << 20)
    vmem_limit = int(min(max(vmem_limit, 16 << 20), 48 << 20))

    bytes_accessed = 2 * N * HW * itemsize + grid * 128 * 4
    if use_target_weight:
        bytes_accessed += N * jnp.dtype(target_weight.dtype).itemsize
    cost = pl.CostEstimate(
        flops=3 * N * HW + (2 * N if use_target_weight else 0),
        transcendentals=0,
        bytes_accessed=int(bytes_accessed))

    partials = pl.pallas_call(
        kernel,
        out_shape=jax.ShapeDtypeStruct((grid, 128), jnp.float32),
        grid_spec=pl.GridSpec(
            grid=(grid,),
            in_specs=in_specs,
            out_specs=pl.BlockSpec((1, 128), lambda i: (i, 0)),
        ),
        compiler_params=pltpu.CompilerParams(
            dimension_semantics=("parallel",),
            vmem_limit_bytes=vmem_limit),
        cost_estimate=cost,
    )(*operands)

    # All 128 lanes of each partial row hold the same value; combine column 0.
    return jnp.sum(partials[:, 0]) / denom


def _reference(output, target, target_weight, use_target_weight):
    B, K, H, W = output.shape
    pred = output.reshape(B, K, H * W).astype(jnp.float32)
    gt = target.reshape(B, K, H * W).astype(jnp.float32)
    loss = 0.0
    for idx in range(K):
        p = pred[:, idx]
        g = gt[:, idx]
        if use_target_weight:
            wk = target_weight[:, idx].astype(jnp.float32)  # (B, 1)
            p = p * wk
            g = g * wk
        loss = loss + jnp.mean((p - g) ** 2)
    return loss / K


if __name__ == "__main__":
    key = jax.random.PRNGKey(0)

    def _check(B, K, H, W, use_w, subkey):
        k1, k2, k3 = jax.random.split(subkey, 3)
        output = jax.random.normal(k1, (B, K, H, W), dtype=jnp.float32)
        target = jax.random.normal(k2, (B, K, H, W), dtype=jnp.float32)
        tw = jax.random.uniform(k3, (B, K, 1), dtype=jnp.float32)
        loss = joints_mse_loss(output, target, tw, use_target_weight=use_w)
        loss = jax.block_until_ready(loss)
        ref = _reference(output, target, tw, use_w)
        assert jnp.allclose(loss, ref, rtol=1e-5, atol=1e-6), (
            (B, K, H, W, use_w), loss, ref)

    k_a, k_b = jax.random.split(key)

    # Canonical small shape (row-aligned N, lane-aligned HW).
    _check(2, 4, 16, 16, True, k_a)
    _check(2, 4, 16, 16, False, k_a)

    # Ragged shape: N % tm != 0 and HW % 128 != 0 -> exercises the in-kernel
    # tail-row mask and the full-extent (non-128-multiple) lane block.
    _check(3, 5, 9, 11, True, k_b)
    _check(3, 5, 9, 11, False, k_b)

    print("KERNEL_OK")
</pallas_src>

<mosaic_0001>
module attributes {stable_mosaic.version = 11 : i64} {
  func.func @_joints_mse_block_kernel(%arg0: i32, %arg1: memref<8x256xf32, #tpu.memory_space<vmem>>, %arg2: memref<8x256xf32, #tpu.memory_space<vmem>>, %arg3: memref<8x1xf32, #tpu.memory_space<vmem>>, %arg4: memref<1x128xf32, #tpu.memory_space<vmem>>) attributes {dimension_semantics = [#tpu.dimension_semantics<parallel>], iteration_bounds = array<i64: 1>, scalar_prefetch = 0 : i64, scratch_operands = 0 : i64, tpu.core_type = #tpu.core_type<tc>, window_params = [{transform_indices = @transform_0, window_bounds = array<i64: 8, 256>}, {transform_indices = @transform_1, window_bounds = array<i64: 8, 256>}, {transform_indices = @transform_2, window_bounds = array<i64: 8, 1>}, {transform_indices = @transform_3, window_bounds = array<i64: 1, 128>}]} {
    %c0 = arith.constant 0 : index
    %c0_0 = arith.constant 0 : index
    %0 = vector.load %arg1[%c0, %c0_0] : memref<8x256xf32, #tpu.memory_space<vmem>>, vector<8x256xf32>
    %c0_1 = arith.constant 0 : index
    %c0_2 = arith.constant 0 : index
    %1 = vector.load %arg2[%c0_1, %c0_2] : memref<8x256xf32, #tpu.memory_space<vmem>>, vector<8x256xf32>
    %2 = arith.subf %0, %1 : vector<8x256xf32>
    %3 = arith.mulf %2, %2 : vector<8x256xf32>
    %c0_3 = arith.constant 0 : index
    %c0_4 = arith.constant 0 : index
    %4 = vector.load %arg3[%c0_3, %c0_4] : memref<8x1xf32, #tpu.memory_space<vmem>>, vector<8x1xf32>
    %5 = arith.mulf %4, %4 : vector<8x1xf32>
    %6 = vector.broadcast %5 : vector<8x1xf32> to vector<8x256xf32>
    %7 = arith.mulf %3, %6 : vector<8x256xf32>
    %8 = vector.shape_cast %7 : vector<8x256xf32> to vector<1x8x256xf32>
    %cst = arith.constant dense<0.000000e+00> : vector<1xf32>
    %9 = vector.multi_reduction <add>, %8, %cst [1, 2] : vector<1x8x256xf32> to vector<1xf32>
    %10 = vector.shape_cast %9 : vector<1xf32> to vector<1x1x1xf32>
    %11 = vector.extract %10[0, 0, 0] : f32 from vector<1x1x1xf32>
    %12 = vector.broadcast %11 : f32 to vector<1x1xf32>
    %13 = vector.shape_cast %12 : vector<1x1xf32> to vector<1x1xf32>
    %14 = vector.broadcast %13 : vector<1x1xf32> to vector<1x128xf32>
    %c0_5 = arith.constant 0 : index
    %c0_6 = arith.constant 0 : index
    %15 = vector.load %arg4[%c0_5, %c0_6] : memref<1x128xf32, #tpu.memory_space<vmem>>, vector<1x128xf32>
    tpu.vector_store %arg4[%c0_5, %c0_6], %14 {strides = array<i32>} : memref<1x128xf32, #tpu.memory_space<vmem>>, vector<1x128xf32>,
    return
  }
  func.func @transform_0(%arg0: i32) -> (i32, i32) {
    %c0_i32 = arith.constant 0 : i32
    %c0_i32_0 = arith.constant 0 : i32
    return %arg0, %c0_i32 : i32, i32
  }
  func.func @transform_1(%arg0: i32) -> (i32, i32) {
    %c0_i32 = arith.constant 0 : i32
    %c0_i32_0 = arith.constant 0 : i32
    return %arg0, %c0_i32 : i32, i32
  }
  func.func @transform_2(%arg0: i32) -> (i32, i32) {
    %c0_i32 = arith.constant 0 : i32
    %c0_i32_0 = arith.constant 0 : i32
    return %arg0, %c0_i32 : i32, i32
  }
  func.func @transform_3(%arg0: i32) -> (i32, i32) {
    %c0_i32 = arith.constant 0 : i32
    %c0_i32_0 = arith.constant 0 : i32
    return %arg0, %c0_i32 : i32, i32
  }
}

</mosaic_0001>

<llo_original>
// kernel: tpu_custom_call.1
$region0: #{tpu_custom_call.1}
  #allocation0 [shape = 'u32[]', space=smem, size = 0x4, offset = 0x4, fixed_abs, tag = 'smem constant byte address 0x4 - core index']
  #allocation1 [shape = 'u32[72,128]{1,0:T(1,128)}', space=vmem, size = 0x9000, scoped, tag = 'internal scratch']
  %s0 = inlined_call_operand.hbm [shape: f32[8,256], index: 0, kind: input, shape index: {}]
  %s1 = inlined_call_operand.hbm [shape: f32[8,256], index: 1, kind: input, shape index: {}]
  %s2 = inlined_call_operand.vmem [shape: f32[8,1], index: 2, kind: input, shape index: {}]
  %s3 = inlined_call_operand.hbm [shape: f32[1,128], index: 3, kind: output, shape index: {}]
  %s4 = sld [smem:[#allocation0]]
  $region30: #{tpu_custom_call.1} parent=0
    _
  %s6 = ssub.s32 1, %s4
  %s7 = scalar_select 0, %s6, %s4
  $region1: #{tpu_custom_call.1} parent=0
    #allocation2 [shape = 'u8[8192]{0}', space=vmem, size = 0x2000, scoped, tag = 'input window, operand 0, single buffered']
    #allocation3 [shape = 's32[1]{0}', space=sflag, size = 0x4, scoped, tag = 'scoped memory for tpu_custom_call.1']
    #allocation4 [shape = 's32[1]{0}', space=sflag, size = 0x4, scoped, tag = 'scoped memory for tpu_custom_call.1']
    #allocation5 [shape = 'u8[8192]{0}', space=vmem, size = 0x2000, scoped, tag = 'input window, operand 1, single buffered']
    #allocation6 [shape = 's32[1]{0}', space=sflag, size = 0x4, scoped, tag = 'scoped memory for tpu_custom_call.1']
    #allocation7 [shape = 'u8[512]{0}', space=vmem, size = 0x400, scoped, tag = 'output window, operand 0, single buffered']
    %8 = vsyncpa [#allocation3], 0
    %9 = vsyncpa [#allocation6], 0
    %10 = vsyncpa [#allocation4], 0
    // Predicated region
    $region2: #{tpu_custom_call.1} parent=1 // pred_check
      _
    $region3: #{tpu_custom_call.1} parent=1 // pred_check_branch
      %12 = sbr.rel (0) target = $region5
    $region4: #{tpu_custom_call.1} parent=1 // pred_region
      %14 = vsyncadd [#allocation3], 0
      %s16 = sshll.u32 %s0, 4
      %s17 = int_to_ptr.hbm [resolvable:$true] %s16
      %s18 = sshll.u32 [#allocation2], 4
      %s19 = int_to_ptr.vmem [resolvable:$true] %s18
      %21 = dma.hbm_to_vmem [thread:$0]  %s17, 256, %s19, [#allocation3]
    $region5: #{tpu_custom_call.1} parent=1 // pred_fallthru
      _
    // Predicated region
    $region6: #{tpu_custom_call.1} parent=1 // pred_check
      _
    $region7: #{tpu_custom_call.1} parent=1 // pred_check_branch
      %23 = sbr.rel (0) target = $region9
    $region8: #{tpu_custom_call.1} parent=1 // pred_region
      %25 = vsyncadd [#allocation6], 0
      %s27 = sshll.u32 %s1, 4
      %s28 = int_to_ptr.hbm [resolvable:$true] %s27
      %s29 = sshll.u32 [#allocation5], 4
      %s30 = int_to_ptr.vmem [resolvable:$true] %s29
      %32 = dma.hbm_to_vmem [thread:$0]  %s28, 256, %s30, [#allocation6]
    $region9: #{tpu_custom_call.1} parent=1 // pred_fallthru
      _
    // Predicated region
    $region10: #{tpu_custom_call.1} parent=1 // pred_check
      _
    $region11: #{tpu_custom_call.1} parent=1 // pred_check_branch
      %34 = sbr.rel (0) target = $region13
    $region12: #{tpu_custom_call.1} parent=1 // pred_region
      _
    $region13: #{tpu_custom_call.1} parent=1 // pred_fallthru
      _
    // Predicated region
    $region14: #{tpu_custom_call.1} parent=1 // pred_check
      _
    $region15: #{tpu_custom_call.1} parent=1 // pred_check_branch
      %36 = sbr.rel (0) target = $region17
    $region16: #{tpu_custom_call.1} parent=1 // pred_region
      %38 = dma.done [#allocation3], 256
    $region17: #{tpu_custom_call.1} parent=1 // pred_fallthru
      _
    // Predicated region
    $region18: #{tpu_custom_call.1} parent=1 // pred_check
      _
    $region19: #{tpu_custom_call.1} parent=1 // pred_check_branch
      %40 = sbr.rel (0) target = $region21
    $region20: #{tpu_custom_call.1} parent=1 // pred_region
      %42 = dma.done [#allocation6], 256
    $region21: #{tpu_custom_call.1} parent=1 // pred_fallthru
      _
    %v43 = vld [vmem:[#allocation2] sm:$0xff]
    %v44 = vld [vmem:[#allocation2 + $0x8] sm:$0xff]
    %v45 = vld [vmem:[#allocation5] sm:$0xff]
    %v46 = vld [vmem:[#allocation5 + $0x8] sm:$0xff]
    %v47 = vsub.f32 %v43, %v45
    %v48 = vsub.f32 %v44, %v46
    %v49 = vmul.f32 %v47, %v47
    %v50 = vmul.f32 %v48, %v48
    %v51 = vld [vmem:[%s2] sm:$0xff]
    %v52 = vmul.f32 %v51, %v51
    %54 = vset.pattern.permute.xlu0 0
    %55 = vperm.xlu0 %54, %v52
    %v56 = vpop.permute.xlu0 %55
    %v58 = vmul.f32 %v49, %v56
    %v59 = vmul.f32 %v50, %v56
    %v60 = vadd.f32 %v58, %v59
    %61 = vadd.xlane.f32.xlu0 %v60
    %v62 = vpop.xlane.xlu0 %61
    %v63 = vrot.slane %v62, 4
    %v64 = vadd.f32 %v62, %v63
    %v65 = vrot.slane %v64, 2
    %v66 = vadd.f32 %v64, %v65
    %v67 = vrot.slane %v66, 1
    %v68 = vadd.f32 %v66, %v67
    %s69 = vtos %v68
    %v70 = vstv %s69
    %71 = vst [vmem:[#allocation7] sm:$0x1] %v70
    // Predicated region
    $region22: #{tpu_custom_call.1} parent=1 // pred_check
      _
    $region23: #{tpu_custom_call.1} parent=1 // pred_check_branch
      %73 = sbr.rel (0) target = $region25
    $region24: #{tpu_custom_call.1} parent=1 // pred_region
      %75 = vsyncadd [#allocation4], 0
      %s77 = sshll.u32 [#allocation7], 4
      %s78 = int_to_ptr.vmem [resolvable:$true] %s77
      %s79 = sshll.u32 %s3, 4
      %s80 = int_to_ptr.hbm [resolvable:$true] %s79
      %82 = dma.vmem_to_hbm [thread:$0]  %s78, 16, %s80, [#allocation4]
    $region25: #{tpu_custom_call.1} parent=1 // pred_fallthru
      _
    // Predicated region
    $region26: #{tpu_custom_call.1} parent=1 // pred_check
      _
    $region27: #{tpu_custom_call.1} parent=1 // pred_check_branch
      %84 = sbr.rel (0) target = $region29
    $region28: #{tpu_custom_call.1} parent=1 // pred_region
      %86 = dma.done [#allocation4], 16
    $region29: #{tpu_custom_call.1} parent=1 // pred_fallthru
      _
    %87 = vsyncpa [#allocation3], 1
    %88 = vsyncpa [#allocation6], 1
    %89 = vsyncpa [#allocation4], 1

</llo_original>
